<compile_context>
chip_gen: v7x
topology: tpu7x:2x2x1
jax: 0.10.0
libtpu: 0.0.40
codegen_flags: <defaults>
</compile_context>

<pallas_src>
import functools

import jax
import jax.numpy as jnp
from jax.experimental import pallas as pl
from jax.experimental.pallas import tpu as pltpu


def _cdiv(a, b):
    return -(-a // b)


def _round_up(x, m):
    return _cdiv(x, m) * m


def _triplet_loss_kernel(a_ref, p_ref, n_ref, out_ref, *, margin, batch, tb):
    i = pl.program_id(0)

    a = a_ref[...].astype(jnp.float32)
    p = p_ref[...].astype(jnp.float32)
    n = n_ref[...].astype(jnp.float32)

    # dp - dn = sum((a-p)^2) - sum((a-n)^2) = sum((p - n) * (p + n - 2a))
    # -> a single cross-lane (XLU) reduction per row instead of two.
    d = jnp.sum((p - n) * (p + n - 2.0 * a), axis=1, keepdims=True)  # (tb, 1)

    # losses = relu(dp - dn + margin)
    losses = jnp.maximum(d + jnp.float32(margin), 0.0)

    # Mask rows that came from batch padding (zero-padded rows would otherwise
    # contribute relu(margin) = margin each). Only needed if padding exists.
    if batch % tb != 0:
        row_ids = jax.lax.broadcasted_iota(jnp.int32, (tb, 1), 0) + i * tb
        losses = jnp.where(row_ids < batch, losses, 0.0)

    partial = jnp.sum(losses)
    # Lane-dense partial-sum output (one live value broadcast over the lanes).
    out_ref[...] = jnp.full(out_ref.shape, partial, dtype=jnp.float32)


def _choose_block_rows(batch, feat, dtype, block_rows=None):
    """Pick a batch-tile size whose double-buffered working set fits VMEM."""
    if block_rows is not None:
        return max(8, _round_up(int(block_rows), 8))
    itemsize = jnp.dtype(dtype).itemsize
    # 3 inputs x 2 pipeline buffers x tb x D x itemsize kept under ~24 MiB:
    # safe on v7x's 64 MiB physical VMEM and well inside v5e/v6e with the
    # raised vmem limit below; large enough (256-512 rows for D<=4 K f32) to
    # sit near the measured HBM roofline on v6e.
    budget = 24 * 1024 * 1024
    tb_max = max(8, min(512, (budget // (6 * feat * itemsize)) // 8 * 8))
    if batch <= tb_max:
        return _round_up(batch, 8)
    num_tiles = _cdiv(batch, tb_max)
    return _round_up(_cdiv(batch, num_tiles), 8)


def _triplet_loss_pallas(anchor, positive, negative, margin, size_average,
                         block_rows=None):
    batch, feat = anchor.shape
    tb = _choose_block_rows(batch, feat, anchor.dtype, block_rows)
    batch_padded = _round_up(batch, tb)
    if batch_padded != batch:
        pad = ((0, batch_padded - batch), (0, 0))
        anchor = jnp.pad(anchor, pad)
        positive = jnp.pad(positive, pad)
        negative = jnp.pad(negative, pad)
    num_tiles = batch_padded // tb

    kernel = functools.partial(
        _triplet_loss_kernel, margin=float(margin), batch=batch, tb=tb
    )
    itemsize = jnp.dtype(anchor.dtype).itemsize

    partials = pl.pallas_call(
        kernel,
        out_shape=jax.ShapeDtypeStruct((num_tiles, 128), jnp.float32),
        grid=(num_tiles,),
        in_specs=[
            pl.BlockSpec((tb, feat), lambda i: (i, 0)),
            pl.BlockSpec((tb, feat), lambda i: (i, 0)),
            pl.BlockSpec((tb, feat), lambda i: (i, 0)),
        ],
        out_specs=pl.BlockSpec((1, 128), lambda i: (i, 0)),
        compiler_params=pltpu.CompilerParams(
            # Independent per-tile partials -> batch-tile axis is parallel
            # (two TensorCores split the tiles on v7x; harmless elsewhere).
            dimension_semantics=("parallel",),
            # Above the 16 MiB (v5e) / 32 MiB (v6e, v7x) scoped defaults,
            # with headroom below v7x's 64 MiB physical VMEM.
            vmem_limit_bytes=48 * 1024 * 1024,
        ),
        cost_estimate=pl.CostEstimate(
            flops=6 * batch_padded * feat,
            transcendentals=0,
            bytes_accessed=3 * batch_padded * feat * itemsize
            + num_tiles * 128 * 4,
        ),
    )(anchor, positive, negative)

    total = jnp.sum(partials[:, 0])
    if size_average:
        return total / jnp.float32(batch)  # divide by the TRUE batch once
    return total


def _triplet_loss_ref(anchor, positive, negative, margin, size_average):
    a = anchor.astype(jnp.float32)
    p = positive.astype(jnp.float32)
    n = negative.astype(jnp.float32)
    dp = jnp.sum((a - p) ** 2, axis=1)
    dn = jnp.sum((a - n) ** 2, axis=1)
    losses = jnp.maximum(dp - dn + jnp.float32(margin), 0.0)
    return jnp.mean(losses) if size_average else jnp.sum(losses)


def triplet_loss(anchor, positive, negative, margin, size_average=True, *,
                 force_pallas=False, block_rows=None):
    """Pallas TPU implementation of TripletLoss.forward.

    anchor, positive, negative: (B, D) float arrays.
    Returns a scalar float32 (mean over batch if size_average else sum).
    For best lane utilization feed a feature dim D that is a multiple of 128.
    """
    assert anchor.shape == positive.shape == negative.shape
    assert anchor.ndim == 2

    # Toy problems: pallas_call launch + per-step grid overhead dwarfs the
    # nanoseconds of actual compute -> plain XLA expression is faster.
    if not force_pallas and anchor.size < (1 << 16):
        return _triplet_loss_ref(anchor, positive, negative, margin,
                                 size_average)
    return _triplet_loss_pallas(anchor, positive, negative, margin,
                                size_average, block_rows=block_rows)


if __name__ == "__main__":
    key = jax.random.PRNGKey(0)

    margin = 1.0

    # Case 1: small embedding batch, lane-dense feature dim, single tile.
    k_a, k_p, k_n, key = jax.random.split(key, 4)
    B, D = 16, 128
    anchor = jax.random.normal(k_a, (B, D), dtype=jnp.float32)
    positive = jax.random.normal(k_p, (B, D), dtype=jnp.float32)
    negative = jax.random.normal(k_n, (B, D), dtype=jnp.float32)

    loss_mean = triplet_loss(anchor, positive, negative, margin,
                             size_average=True, force_pallas=True)
    loss_sum = triplet_loss(anchor, positive, negative, margin,
                            size_average=False, force_pallas=True)
    jax.block_until_ready(loss_mean)
    jax.block_until_ready(loss_sum)

    dp = jnp.sum((anchor - positive) ** 2, axis=1)
    dn = jnp.sum((anchor - negative) ** 2, axis=1)
    losses_ref = jnp.maximum(dp - dn + margin, 0.0)
    assert jnp.allclose(loss_mean, losses_ref.mean(), rtol=1e-5, atol=1e-5)
    assert jnp.allclose(loss_sum, losses_ref.sum(), rtol=1e-5, atol=1e-5)

    # Case 2: ragged batch + multi-tile grid (exercises padding mask and the
    # parallel partial-sum reduction): B=20 with forced 8-row tiles -> 3 tiles,
    # 4 padded rows that must contribute exactly 0.
    k_a2, k_p2, k_n2, key = jax.random.split(key, 4)
    B2, D2 = 20, 128
    a2 = jax.random.normal(k_a2, (B2, D2), dtype=jnp.float32)
    p2 = jax.random.normal(k_p2, (B2, D2), dtype=jnp.float32)
    n2 = jax.random.normal(k_n2, (B2, D2), dtype=jnp.float32)

    loss2_mean = triplet_loss(a2, p2, n2, margin, size_average=True,
                              force_pallas=True, block_rows=8)
    loss2_sum = triplet_loss(a2, p2, n2, margin, size_average=False,
                             force_pallas=True, block_rows=8)
    jax.block_until_ready(loss2_mean)
    jax.block_until_ready(loss2_sum)

    dp2 = jnp.sum((a2 - p2) ** 2, axis=1)
    dn2 = jnp.sum((a2 - n2) ** 2, axis=1)
    losses2_ref = jnp.maximum(dp2 - dn2 + margin, 0.0)
    assert jnp.allclose(loss2_mean, losses2_ref.mean(), rtol=1e-5, atol=1e-5)
    assert jnp.allclose(loss2_sum, losses2_ref.sum(), rtol=1e-5, atol=1e-5)

    print("KERNEL_OK")
</pallas_src>

<mosaic_0001>
module attributes {stable_mosaic.version = 11 : i64} {
  func.func @_triplet_loss_kernel(%arg0: i32, %arg1: memref<16x128xf32, #tpu.memory_space<vmem>>, %arg2: memref<16x128xf32, #tpu.memory_space<vmem>>, %arg3: memref<16x128xf32, #tpu.memory_space<vmem>>, %arg4: memref<1x128xf32, #tpu.memory_space<vmem>>) attributes {dimension_semantics = [#tpu.dimension_semantics<parallel>], iteration_bounds = array<i64: 1>, scalar_prefetch = 0 : i64, scratch_operands = 0 : i64, tpu.core_type = #tpu.core_type<tc>, window_params = [{transform_indices = @transform_0, window_bounds = array<i64: 16, 128>}, {transform_indices = @transform_1, window_bounds = array<i64: 16, 128>}, {transform_indices = @transform_2, window_bounds = array<i64: 16, 128>}, {transform_indices = @transform_3, window_bounds = array<i64: 1, 128>}]} {
    %c0 = arith.constant 0 : index
    %c0_0 = arith.constant 0 : index
    %0 = vector.load %arg1[%c0, %c0_0] : memref<16x128xf32, #tpu.memory_space<vmem>>, vector<16x128xf32>
    %c0_1 = arith.constant 0 : index
    %c0_2 = arith.constant 0 : index
    %1 = vector.load %arg2[%c0_1, %c0_2] : memref<16x128xf32, #tpu.memory_space<vmem>>, vector<16x128xf32>
    %c0_3 = arith.constant 0 : index
    %c0_4 = arith.constant 0 : index
    %2 = vector.load %arg3[%c0_3, %c0_4] : memref<16x128xf32, #tpu.memory_space<vmem>>, vector<16x128xf32>
    %3 = arith.subf %1, %2 : vector<16x128xf32>
    %4 = arith.addf %1, %2 : vector<16x128xf32>
    %cst = arith.constant 2.000000e+00 : f32
    %5 = vector.broadcast %cst : f32 to vector<16x128xf32>
    %6 = arith.mulf %5, %0 : vector<16x128xf32>
    %7 = arith.subf %4, %6 : vector<16x128xf32>
    %8 = arith.mulf %3, %7 : vector<16x128xf32>
    %cst_5 = arith.constant dense<0.000000e+00> : vector<16xf32>
    %9 = vector.multi_reduction <add>, %8, %cst_5 [1] : vector<16x128xf32> to vector<16xf32>
    %10 = vector.shape_cast %9 : vector<16xf32> to vector<16x1xf32>
    %cst_6 = arith.constant 1.000000e+00 : f32
    %11 = vector.broadcast %cst_6 : f32 to vector<16x1xf32>
    %12 = arith.addf %10, %11 : vector<16x1xf32>
    %cst_7 = arith.constant 0.000000e+00 : f32
    %13 = vector.broadcast %cst_7 : f32 to vector<16x1xf32>
    %14 = arith.maximumf %12, %13 : vector<16x1xf32>
    %15 = vector.shape_cast %14 : vector<16x1xf32> to vector<1x16x1xf32>
    %cst_8 = arith.constant dense<0.000000e+00> : vector<1xf32>
    %16 = vector.multi_reduction <add>, %15, %cst_8 [1, 2] : vector<1x16x1xf32> to vector<1xf32>
    %17 = vector.shape_cast %16 : vector<1xf32> to vector<1x1x1xf32>
    %18 = vector.extract %17[0, 0, 0] : f32 from vector<1x1x1xf32>
    %19 = vector.broadcast %18 : f32 to vector<1x128xf32>
    %c0_9 = arith.constant 0 : index
    %c0_10 = arith.constant 0 : index
    %20 = vector.load %arg4[%c0_9, %c0_10] : memref<1x128xf32, #tpu.memory_space<vmem>>, vector<1x128xf32>
    tpu.vector_store %arg4[%c0_9, %c0_10], %19 {strides = array<i32>} : memref<1x128xf32, #tpu.memory_space<vmem>>, vector<1x128xf32>,
    return
  }
  func.func @transform_0(%arg0: i32) -> (i32, i32) {
    %c0_i32 = arith.constant 0 : i32
    %c0_i32_0 = arith.constant 0 : i32
    return %arg0, %c0_i32 : i32, i32
  }
  func.func @transform_1(%arg0: i32) -> (i32, i32) {
    %c0_i32 = arith.constant 0 : i32
    %c0_i32_0 = arith.constant 0 : i32
    return %arg0, %c0_i32 : i32, i32
  }
  func.func @transform_2(%arg0: i32) -> (i32, i32) {
    %c0_i32 = arith.constant 0 : i32
    %c0_i32_0 = arith.constant 0 : i32
    return %arg0, %c0_i32 : i32, i32
  }
  func.func @transform_3(%arg0: i32) -> (i32, i32) {
    %c0_i32 = arith.constant 0 : i32
    %c0_i32_0 = arith.constant 0 : i32
    return %arg0, %c0_i32 : i32, i32
  }
}

</mosaic_0001>

<llo_original>
// kernel: tpu_custom_call.1
$region0: #{tpu_custom_call.1}
  #allocation0 [shape = 'u32[]', space=smem, size = 0x4, offset = 0x4, fixed_abs, tag = 'smem constant byte address 0x4 - core index']
  #allocation1 [shape = 'u32[144,128]{1,0:T(1,128)}', space=vmem, size = 0x12000, scoped, tag = 'internal scratch']
  %s0 = inlined_call_operand.hbm [shape: f32[16,128], index: 0, kind: input, shape index: {}]
  %s1 = inlined_call_operand.hbm [shape: f32[16,128], index: 1, kind: input, shape index: {}]
  %s2 = inlined_call_operand.hbm [shape: f32[16,128], index: 2, kind: input, shape index: {}]
  %s3 = inlined_call_operand.hbm [shape: f32[1,128], index: 3, kind: output, shape index: {}]
  %s4 = sld [smem:[#allocation0]]
  $region34: #{tpu_custom_call.1} parent=0
    _
  %s6 = ssub.s32 1, %s4
  %s7 = scalar_select 0, %s6, %s4
  $region1: #{tpu_custom_call.1} parent=0
    #allocation2 [shape = 'u8[8192]{0}', space=vmem, size = 0x2000, scoped, tag = 'input window, operand 0, single buffered']
    #allocation3 [shape = 's32[1]{0}', space=sflag, size = 0x4, scoped, tag = 'scoped memory for tpu_custom_call.1']
    #allocation4 [shape = 's32[1]{0}', space=sflag, size = 0x4, scoped, tag = 'scoped memory for tpu_custom_call.1']
    #allocation5 [shape = 'u8[8192]{0}', space=vmem, size = 0x2000, scoped, tag = 'input window, operand 1, single buffered']
    #allocation6 [shape = 's32[1]{0}', space=sflag, size = 0x4, scoped, tag = 'scoped memory for tpu_custom_call.1']
    #allocation7 [shape = 'u8[8192]{0}', space=vmem, size = 0x2000, scoped, tag = 'input window, operand 2, single buffered']
    #allocation8 [shape = 'u8[512]{0}', space=vmem, size = 0x400, scoped, tag = 'output window, operand 0, single buffered']
    %8 = vsyncpa [#allocation3], 0
    %9 = vsyncpa [#allocation6], 0
    %10 = vsyncpa [#allocation4], 0
    // Predicated region
    $region2: #{tpu_custom_call.1} parent=1 // pred_check
      _
    $region3: #{tpu_custom_call.1} parent=1 // pred_check_branch
      %12 = sbr.rel (0) target = $region5
    $region4: #{tpu_custom_call.1} parent=1 // pred_region
      %s14 = ssub.s32 256, 256
      %15 = vsyncadd [#allocation3], %s14
      %s16 = sshll.u32 [#allocation2], 4
      %s17 = int_to_ptr.vmem [resolvable:$true] %s16
      %22 = dma.hbm_to_vmem [thread:$0]  %s0, 256, %s17, [#allocation3], 128, 128, 8
    $region5: #{tpu_custom_call.1} parent=1 // pred_fallthru
      _
    // Predicated region
    $region6: #{tpu_custom_call.1} parent=1 // pred_check
      _
    $region7: #{tpu_custom_call.1} parent=1 // pred_check_branch
      %24 = sbr.rel (0) target = $region9
    $region8: #{tpu_custom_call.1} parent=1 // pred_region
      %s26 = ssub.s32 256, 256
      %27 = vsyncadd [#allocation6], %s26
      %s28 = sshll.u32 [#allocation5], 4
      %s29 = int_to_ptr.vmem [resolvable:$true] %s28
      %34 = dma.hbm_to_vmem [thread:$0]  %s1, 256, %s29, [#allocation6], 128, 128, 8
    $region9: #{tpu_custom_call.1} parent=1 // pred_fallthru
      _
    // Predicated region
    $region10: #{tpu_custom_call.1} parent=1 // pred_check
      _
    $region11: #{tpu_custom_call.1} parent=1 // pred_check_branch
      %36 = sbr.rel (0) target = $region13
    $region12: #{tpu_custom_call.1} parent=1 // pred_region
      %s38 = ssub.s32 256, 256
      %39 = vsyncadd [#allocation6], %s38
      %s40 = sshll.u32 [#allocation7], 4
      %s41 = int_to_ptr.vmem [resolvable:$true] %s40
      %46 = dma.hbm_to_vmem [thread:$0]  %s2, 256, %s41, [#allocation6], 128, 128, 8
    $region13: #{tpu_custom_call.1} parent=1 // pred_fallthru
      _
    // Predicated region
    $region14: #{tpu_custom_call.1} parent=1 // pred_check
      _
    $region15: #{tpu_custom_call.1} parent=1 // pred_check_branch
      %48 = sbr.rel (0) target = $region17
    $region16: #{tpu_custom_call.1} parent=1 // pred_region
      %49 = dma.done [#allocation3], 256
    $region17: #{tpu_custom_call.1} parent=1 // pred_fallthru
      _
    // Predicated region
    $region18: #{tpu_custom_call.1} parent=1 // pred_check
      _
    $region19: #{tpu_custom_call.1} parent=1 // pred_check_branch
      %51 = sbr.rel (0) target = $region21
    $region20: #{tpu_custom_call.1} parent=1 // pred_region
      %52 = dma.done [#allocation6], 256
    $region21: #{tpu_custom_call.1} parent=1 // pred_fallthru
      _
    // Predicated region
    $region22: #{tpu_custom_call.1} parent=1 // pred_check
      _
    $region23: #{tpu_custom_call.1} parent=1 // pred_check_branch
      %54 = sbr.rel (0) target = $region25
    $region24: #{tpu_custom_call.1} parent=1 // pred_region
      %55 = dma.done [#allocation6], 256
    $region25: #{tpu_custom_call.1} parent=1 // pred_fallthru
      _
    %v56 = vld [vmem:[#allocation2] sm:$0xff]
    %v57 = vld [vmem:[#allocation2 + $0x8] sm:$0xff]
    %v58 = vld [vmem:[#allocation5] sm:$0xff]
    %v59 = vld [vmem:[#allocation5 + $0x8] sm:$0xff]
    %v60 = vld [vmem:[#allocation7] sm:$0xff]
    %v61 = vld [vmem:[#allocation7 + $0x8] sm:$0xff]
    %v62 = vsub.f32 %v58, %v60
    %v63 = vsub.f32 %v59, %v61
    %v64 = vadd.f32 %v58, %v60
    %v65 = vadd.f32 %v59, %v61
    %v66 = vmul.f32 %v56, 2.0
    %v67 = vmul.f32 %v57, 2.0
    %v68 = vsub.f32 %v64, %v66
    %v69 = vsub.f32 %v65, %v67
    %v70 = vmul.f32 %v62, %v68
    %v71 = vmul.f32 %v63, %v69
    %72 = vadd.xlane.f32.xlu0 %v70
    %v73 = vpop.xlane.xlu0 %72
    %74 = vadd.xlane.f32.xlu0 %v71
    %v75 = vpop.xlane.xlu0 %74
    %v76 = vadd.f32 %v73, 1.0
    %v77 = vadd.f32 %v75, 1.0
    %v78 = vmax.f32 %v76, 0.0
    %v79 = vmax.f32 %v77, 0.0
    %vm80 = vcmask 7168
    %v81 = vsel %vm80, %v78, 0.0
    %v82 = vsel %vm80, %v79, 0.0
    %v83 = vadd.f32 %v81, %v82
    %84 = vadd.xlane.f32.xlu0 %v83
    %v85 = vpop.xlane.xlu0 %84
    %v86 = vrot.slane %v85, 4
    %v87 = vadd.f32 %v85, %v86
    %v88 = vrot.slane %v87, 2
    %v89 = vadd.f32 %v87, %v88
    %v90 = vrot.slane %v89, 1
    %v91 = vadd.f32 %v89, %v90
    %s92 = vtos %v91
    %v93 = vstv %s92
    %94 = vst [vmem:[#allocation8] sm:$0x1] %v93
    // Predicated region
    $region26: #{tpu_custom_call.1} parent=1 // pred_check
      _
    $region27: #{tpu_custom_call.1} parent=1 // pred_check_branch
      %96 = sbr.rel (0) target = $region29
    $region28: #{tpu_custom_call.1} parent=1 // pred_region
      %s98 = ssub.s32 16, 16
      %99 = vsyncadd [#allocation4], %s98
      %s101 = sshll.u32 [#allocation8], 4
      %s102 = int_to_ptr.vmem [resolvable:$true] %s101
      %104 = dma.vmem_to_hbm [thread:$0]  %s102, 16, %s3, [#allocation4]
    $region29: #{tpu_custom_call.1} parent=1 // pred_fallthru
      _
    // Predicated region
    $region30: #{tpu_custom_call.1} parent=1 // pred_check
      _
    $region31: #{tpu_custom_call.1} parent=1 // pred_check_branch
      %106 = sbr.rel (0) target = $region33
    $region32: #{tpu_custom_call.1} parent=1 // pred_region
      %107 = dma.done [#allocation4], 16
    $region33: #{tpu_custom_call.1} parent=1 // pred_fallthru
      _
    %108 = vsyncpa [#allocation3], 1
    %109 = vsyncpa [#allocation6], 1
    %110 = vsyncpa [#allocation4], 1

</llo_original>
